<compile_context>
chip_gen: v7x
topology: tpu7x:2x2x1
jax: 0.10.0
libtpu: 0.0.40
codegen_flags: <defaults>
</compile_context>

<pallas_src>
import functools

import jax
import jax.numpy as jnp
from jax.experimental import pallas as pl
from jax.experimental.pallas import tpu as pltpu


def _round_up(x, m):
    return (x + m - 1) // m * m


# ----------------------------------------------------------------------------------
# Pallas kernels
# ----------------------------------------------------------------------------------
def _conv_kernel(x_ref, w_ref, s_ref, b_ref, o_ref, *, offs, relu):
    """Dense conv: sum over statically-offset tap slabs of one MXU dot each,
    then folded-BN affine + optional ReLU.  x_ref: (L, Cin) bf16 flattened padded
    plane; w_ref: (T, Cin, Coutp) bf16; s/b: (1, Coutp) f32; o_ref: (M, Coutp)."""
    M = o_ref.shape[0]
    acc = jnp.dot(x_ref[offs[0]:offs[0] + M, :], w_ref[0],
                  preferred_element_type=jnp.float32)
    for t in range(1, len(offs)):
        off = offs[t]
        acc = acc + jnp.dot(x_ref[off:off + M, :], w_ref[t],
                            preferred_element_type=jnp.float32)
    y = acc * s_ref[...] + b_ref[...]
    if relu:
        y = jnp.maximum(y, 0.0)
    o_ref[...] = y.astype(o_ref.dtype)


def _sepconv_kernel(x_ref, dw_ref, s1_ref, b1_ref, pw_ref, s2_ref, b2_ref, o_ref,
                    *, offs, relu):
    """Fused SeparableConv2d + BN + ReLU: true depthwise (per-tap VPU MAC with a
    (1, Cin) weight row), dw-BN affine, pointwise 1x1 MXU matmul, pw-BN affine + ReLU.
    The depthwise intermediate never leaves VMEM."""
    M = o_ref.shape[0]
    acc = x_ref[offs[0]:offs[0] + M, :].astype(jnp.float32) * dw_ref[0:1, :]
    for t in range(1, len(offs)):
        off = offs[t]
        acc = acc + x_ref[off:off + M, :].astype(jnp.float32) * dw_ref[t:t + 1, :]
    h = acc * s1_ref[...] + b1_ref[...]
    y = jnp.dot(h.astype(pw_ref.dtype), pw_ref[...],
                preferred_element_type=jnp.float32)
    y = y * s2_ref[...] + b2_ref[...]
    if relu:
        y = jnp.maximum(y, 0.0)
    o_ref[...] = y.astype(o_ref.dtype)


# ----------------------------------------------------------------------------------
# Wrappers
# ----------------------------------------------------------------------------------
def _flatten_padded(x, KH, KW, dh, dw):
    """Pad for 'same' conv and flatten spatial dims so that kernel tap (ky,kx) is the
    contiguous row range [ky*dh*Wp + kx*dw, ... + H*Wp) of the flattened plane."""
    N, H, W, Cin = x.shape
    ph, pw = dh * (KH // 2), dw * (KW // 2)
    Wp = W + 2 * pw
    extra = 1 if pw > 0 else 0            # one extra bottom row so the last tap slab fits
    Hp = H + 2 * ph + extra
    if ph or pw or extra:
        x = jnp.pad(x, ((0, 0), (ph, ph + extra), (pw, pw), (0, 0)))
    x_flat = x.reshape(N, Hp * Wp, Cin)
    offs = tuple(ky * dh * Wp + kx * dw for ky in range(KH) for kx in range(KW))
    return x_flat, offs, Wp


def conv2d_bn_act(x, w, scale, bias, *, dilation=(1, 1), relu=True,
                  out_dtype=jnp.bfloat16):
    """'same' conv (padding = dilation * (k//2)) + folded-BN affine + optional ReLU.

    x: (N, H, W, Cin) NHWC.  w: (KH, KW, Cin, Cout).  scale/bias: (Cout,).
    """
    N, H, W, Cin = x.shape
    KH, KW, _, Cout = w.shape
    dh, dw_ = dilation

    x_flat, offs, Wp = _flatten_padded(x.astype(jnp.bfloat16), KH, KW, dh, dw_)
    L = x_flat.shape[1]
    M = H * Wp
    T = KH * KW

    # Lane-dense output: zero-pad Cout (and scale/bias) to a multiple of 128.
    Coutp = _round_up(Cout, 128)
    pad_c = Coutp - Cout
    w_t = w.reshape(T, Cin, Cout)
    if pad_c:
        w_t = jnp.pad(w_t, ((0, 0), (0, 0), (0, pad_c)))
        scale = jnp.pad(scale, (0, pad_c))
        bias = jnp.pad(bias, (0, pad_c))
    w_t = w_t.astype(jnp.bfloat16)
    s2 = scale.reshape(1, Coutp).astype(jnp.float32)
    b2 = bias.reshape(1, Coutp).astype(jnp.float32)

    out = pl.pallas_call(
        functools.partial(_conv_kernel, offs=offs, relu=relu),
        out_shape=jax.ShapeDtypeStruct((N, M, Coutp), out_dtype),
        grid_spec=pltpu.PrefetchScalarGridSpec(
            num_scalar_prefetch=0,
            grid=(N,),
            in_specs=[
                pl.BlockSpec((None, L, Cin), lambda n: (n, 0, 0)),
                pl.BlockSpec((T, Cin, Coutp), lambda n: (0, 0, 0)),
                pl.BlockSpec((1, Coutp), lambda n: (0, 0)),
                pl.BlockSpec((1, Coutp), lambda n: (0, 0)),
            ],
            out_specs=pl.BlockSpec((None, M, Coutp), lambda n: (n, 0, 0)),
        ),
        compiler_params=pltpu.CompilerParams(
            dimension_semantics=("parallel",)),
    )(x_flat, w_t, s2, b2)

    # Crop the padded-width columns and the padded channels in one slice.
    return out.reshape(N, H, Wp, Coutp)[:, :, :W, :Cout]


def sepconv_bn_act(x, dw_w, dw_scale, dw_bias, pw_w, pw_scale, pw_bias, *,
                   dilation=1, relu=True):
    """Fused SeparableConv2d (depthwise 3x3 dilated + BN + pointwise 1x1) + BN + ReLU."""
    N, H, W, Cin = x.shape
    KH, KW = dw_w.shape[0], dw_w.shape[1]
    d = dilation

    x_flat, offs, Wp = _flatten_padded(x.astype(jnp.bfloat16), KH, KW, d, d)
    L = x_flat.shape[1]
    M = H * Wp
    T = KH * KW

    Cout = pw_w.shape[-1]
    Coutp = _round_up(Cout, 128)
    pad_c = Coutp - Cout
    pw_t = pw_w
    if pad_c:
        pw_t = jnp.pad(pw_t, ((0, 0), (0, pad_c)))
        pw_scale = jnp.pad(pw_scale, (0, pad_c))
        pw_bias = jnp.pad(pw_bias, (0, pad_c))
    pw_t = pw_t.astype(jnp.bfloat16)

    dw_t = dw_w.reshape(T, Cin).astype(jnp.float32)
    s1 = dw_scale.reshape(1, Cin).astype(jnp.float32)
    b1 = dw_bias.reshape(1, Cin).astype(jnp.float32)
    s2 = pw_scale.reshape(1, Coutp).astype(jnp.float32)
    b2 = pw_bias.reshape(1, Coutp).astype(jnp.float32)

    out = pl.pallas_call(
        functools.partial(_sepconv_kernel, offs=offs, relu=relu),
        out_shape=jax.ShapeDtypeStruct((N, M, Coutp), jnp.bfloat16),
        grid_spec=pltpu.PrefetchScalarGridSpec(
            num_scalar_prefetch=0,
            grid=(N,),
            in_specs=[
                pl.BlockSpec((None, L, Cin), lambda n: (n, 0, 0)),
                pl.BlockSpec((T, Cin), lambda n: (0, 0)),
                pl.BlockSpec((1, Cin), lambda n: (0, 0)),
                pl.BlockSpec((1, Cin), lambda n: (0, 0)),
                pl.BlockSpec((Cin, Coutp), lambda n: (0, 0)),
                pl.BlockSpec((1, Coutp), lambda n: (0, 0)),
                pl.BlockSpec((1, Coutp), lambda n: (0, 0)),
            ],
            out_specs=pl.BlockSpec((None, M, Coutp), lambda n: (n, 0, 0)),
        ),
        compiler_params=pltpu.CompilerParams(
            dimension_semantics=("parallel",)),
    )(x_flat, dw_t, s1, b1, pw_t, s2, b2)

    return out.reshape(N, H, Wp, Coutp)[:, :, :W, :Cout]


# ----------------------------------------------------------------------------------
# Interpolation glue (layout only, not the hot path)
# ----------------------------------------------------------------------------------
def upsample_nearest_x2(x):
    return jnp.repeat(jnp.repeat(x, 2, axis=1), 2, axis=2)


def upsample_bilinear_align_corners(x, oh, ow):
    N, H, W, C = x.shape

    def coords(in_s, out_s):
        if in_s == 1 or out_s == 1:
            z = jnp.zeros((out_s,), jnp.int32)
            return z, z, jnp.zeros((out_s,), jnp.float32)
        s = jnp.linspace(0.0, in_s - 1.0, out_s)
        i0 = jnp.floor(s).astype(jnp.int32)
        i1 = jnp.minimum(i0 + 1, in_s - 1)
        return i0, i1, (s - i0).astype(jnp.float32)

    y0, y1, wy = coords(H, oh)
    x0, x1, wx = coords(W, ow)
    a = jnp.take(x, y0, axis=1)
    b = jnp.take(x, y1, axis=1)
    a0, a1 = jnp.take(a, x0, axis=2), jnp.take(a, x1, axis=2)
    b0, b1 = jnp.take(b, x0, axis=2), jnp.take(b, x1, axis=2)
    wx_ = wx[None, None, :, None]
    wy_ = wy[None, :, None, None]
    top = a0 * (1.0 - wx_) + a1 * wx_
    bot = b0 * (1.0 - wx_) + b1 * wx_
    return (top * (1.0 - wy_) + bot * wy_).astype(x.dtype)


# ----------------------------------------------------------------------------------
# Deterministic parameter construction (synthetic; BN folded, eval-mode semantics)
# ----------------------------------------------------------------------------------
class ParamBank:
    def __init__(self, seed=0):
        self._key = jax.random.PRNGKey(seed)

    def normal(self, shape, scale=0.1):
        self._key, k = jax.random.split(self._key)
        return scale * jax.random.normal(k, shape, jnp.float32)


def fold_bn(pb, c):
    gamma = 1.0 + pb.normal((c,), 0.1)
    beta = pb.normal((c,), 0.1)
    mean = pb.normal((c,), 0.1)
    var = 1.0 + jnp.abs(pb.normal((c,), 0.1))
    s = gamma * jax.lax.rsqrt(var + 1e-5)
    return s, beta - mean * s


def make_conv_bn(pb, cin, cout, k):
    w = pb.normal((k, k, cin, cout), 0.2)
    s, b = fold_bn(pb, cout)
    return {"w": w, "scale": s, "bias": b}


def make_sep_block(pb, cin, cout):
    # SeparableConv2d: depthwise 3x3 (true depthwise weights) -> BN -> pointwise 1x1;
    # outer BN + ReLU folded into the pointwise stage.
    dw = pb.normal((3, 3, cin), 0.2)
    s1, b1 = fold_bn(pb, cin)
    pw = pb.normal((cin, cout), 0.2)
    s2, b2 = fold_bn(pb, cout)
    return {"dw_w": dw, "dw_scale": s1, "dw_bias": b1,
            "pw_w": pw, "pw_scale": s2, "pw_bias": b2}


def init_params(pb, enc, mid, num_class):
    p = {}
    p["jpu"] = {
        "conv5": make_conv_bn(pb, enc[-1], mid, 3),
        "conv4": make_conv_bn(pb, enc[-2], mid, 3),
        "conv3": make_conv_bn(pb, enc[-3], mid, 3),
        "dilations": [make_sep_block(pb, 3 * mid, mid) for _ in range(4)],
    }
    c_in = 4 * mid
    p["aspp"] = {
        "b0": make_conv_bn(pb, c_in, mid, 1),
        "branches": [make_conv_bn(pb, c_in, mid, 3) for _ in range(3)],
        "pool": make_conv_bn(pb, c_in, mid, 1),
        "project": make_conv_bn(pb, 5 * mid, mid, 1),
    }
    p["dec1"] = {"c1": make_conv_bn(pb, enc[-4] + mid, 128, 3),
                 "c2": make_conv_bn(pb, 128, 128, 3)}
    p["dec2"] = {"c1": make_conv_bn(pb, enc[-5] + 128, 64, 3),
                 "c2": make_conv_bn(pb, 64, 64, 3)}
    p["dec3"] = {"c1": make_conv_bn(pb, 64, 32, 3),
                 "c2": make_conv_bn(pb, 32, 32, 3)}
    p["final"] = {"w": pb.normal((1, 1, 32, num_class), 0.2),
                  "scale": jnp.ones((num_class,), jnp.float32),
                  "bias": pb.normal((num_class,), 0.1)}
    return p


# ----------------------------------------------------------------------------------
# Forward pass (NHWC)
# ----------------------------------------------------------------------------------
def jpu_forward(p, x_m1, x_m2, x_m3):
    f5 = conv2d_bn_act(x_m1, **p["conv5"], relu=True)
    f4 = conv2d_bn_act(x_m2, **p["conv4"], relu=True)
    f3 = conv2d_bn_act(x_m3, **p["conv3"], relu=True)
    h, w = f3.shape[1], f3.shape[2]
    f5 = upsample_bilinear_align_corners(f5, h, w)
    f4 = upsample_bilinear_align_corners(f4, h, w)
    feat = jnp.concatenate([f5, f4, f3], axis=-1)
    outs = []
    for d, dp in zip((1, 2, 4, 8), p["dilations"]):
        outs.append(sepconv_bn_act(
            feat, dp["dw_w"], dp["dw_scale"], dp["dw_bias"],
            dp["pw_w"], dp["pw_scale"], dp["pw_bias"],
            dilation=d, relu=True))
    return jnp.concatenate(outs, axis=-1)


def aspp_forward(p, x):
    N, H, W, _ = x.shape
    branches = [conv2d_bn_act(x, **p["b0"], relu=True)]
    for dp, dil in zip(p["branches"], [(1, 4), (2, 8), (3, 12)]):
        branches.append(conv2d_bn_act(x, **dp, dilation=dil, relu=True))
    pooled = jnp.mean(x.astype(jnp.float32), axis=(1, 2), keepdims=True)
    pooled = conv2d_bn_act(pooled, **p["pool"], relu=True)
    branches.append(jnp.broadcast_to(pooled, (N, H, W, pooled.shape[-1])))
    y = jnp.concatenate(branches, axis=-1)
    # TODO(synk): ASPP dropout treated as identity (eval-mode forward).
    return conv2d_bn_act(y, **p["project"], relu=True)


def decoder_block(p, x, skip):
    x = upsample_nearest_x2(x)
    if skip is not None:
        x = jnp.concatenate([x, skip], axis=-1)
    x = conv2d_bn_act(x, **p["c1"], relu=True)
    x = conv2d_bn_act(x, **p["c2"], relu=True)
    return x


def fastfcn_improve_head_forward(params, skips):
    # skips: dict keyed skip_m1 (deepest) ... skip_m5 (shallowest used), NHWC.
    skips = {k: v.astype(jnp.bfloat16) for k, v in skips.items()}
    x = jpu_forward(params["jpu"], skips["skip_m1"], skips["skip_m2"], skips["skip_m3"])
    x = aspp_forward(params["aspp"], x)
    x = decoder_block(params["dec1"], x, skips["skip_m4"])
    x = decoder_block(params["dec2"], x, skips["skip_m5"])
    x = decoder_block(params["dec3"], x, None)
    x = conv2d_bn_act(x, params["final"]["w"], params["final"]["scale"],
                      params["final"]["bias"], relu=False, out_dtype=jnp.float32)
    return x


# ----------------------------------------------------------------------------------
if __name__ == "__main__":
    key = jax.random.PRNGKey(0)
    enc = (3, 8, 16, 24, 32, 40)          # encoder_channels (only [-1..-5] are used)
    N, base, mid, num_class = 2, 64, 16, 1

    shapes_nchw = {
        "skip_m5": (N, enc[-5], base // 2, base // 2),
        "skip_m4": (N, enc[-4], base // 4, base // 4),
        "skip_m3": (N, enc[-3], base // 8, base // 8),
        "skip_m2": (N, enc[-2], base // 16, base // 16),
        "skip_m1": (N, enc[-1], base // 32, base // 32),
    }
    keys = jax.random.split(key, len(shapes_nchw))
    skips_nchw = {name: jax.random.normal(k, shp, jnp.float32)
                  for k, (name, shp) in zip(keys, shapes_nchw.items())}

    pb = ParamBank(seed=123)
    params = init_params(pb, enc, mid, num_class)

    # NCHW (PyTorch convention) -> NHWC (kernel layout)
    skips_nhwc = {k: jnp.transpose(v, (0, 2, 3, 1)) for k, v in skips_nchw.items()}

    out_nhwc = fastfcn_improve_head_forward(params, skips_nhwc)
    out = jnp.transpose(out_nhwc, (0, 3, 1, 2))   # back to NCHW
    jax.block_until_ready(out)
    assert out.shape == (N, num_class, base, base), out.shape
    print("KERNEL_OK")
</pallas_src>

<mosaic_0001>
module attributes {stable_mosaic.version = 11 : i64} {
  func.func @_conv_kernel(%arg0: i32, %arg1: memref<1x20x40xbf16, #tpu.memory_space<vmem>>, %arg2: memref<9x40x128xbf16, #tpu.memory_space<vmem>>, %arg3: memref<1x128xf32, #tpu.memory_space<vmem>>, %arg4: memref<1x128xf32, #tpu.memory_space<vmem>>, %arg5: memref<1x8x128xbf16, #tpu.memory_space<vmem>>) attributes {dimension_semantics = [#tpu.dimension_semantics<parallel>], iteration_bounds = array<i64: 2>, scalar_prefetch = 0 : i64, scratch_operands = 0 : i64, tpu.core_type = #tpu.core_type<tc>, window_params = [{transform_indices = @transform_0, window_bounds = array<i64: 1, 20, 40>}, {pipeline_mode = #tpu.pipeline_mode<synchronous>, transform_indices = @transform_1, window_bounds = array<i64: 9, 40, 128>}, {pipeline_mode = #tpu.pipeline_mode<synchronous>, transform_indices = @transform_2, window_bounds = array<i64: 1, 128>}, {pipeline_mode = #tpu.pipeline_mode<synchronous>, transform_indices = @transform_3, window_bounds = array<i64: 1, 128>}, {transform_indices = @transform_4, window_bounds = array<i64: 1, 8, 128>}]} {
    %c0 = arith.constant 0 : index
    %c0_0 = arith.constant 0 : index
    %c0_1 = arith.constant 0 : index
    %0 = vector.load %arg1[%c0, %c0_0, %c0_1] : memref<1x20x40xbf16, #tpu.memory_space<vmem>>, vector<1x8x40xbf16>
    %1 = vector.shape_cast %0 : vector<1x8x40xbf16> to vector<8x40xbf16>
    %c0_2 = arith.constant 0 : index
    %c0_3 = arith.constant 0 : index
    %c0_4 = arith.constant 0 : index
    %2 = vector.load %arg2[%c0_2, %c0_3, %c0_4] : memref<9x40x128xbf16, #tpu.memory_space<vmem>>, vector<1x40x128xbf16>
    %3 = vector.shape_cast %2 : vector<1x40x128xbf16> to vector<40x128xbf16>
    %cst = arith.constant dense<0.000000e+00> : vector<8x128xf32>
    %4 = tpu.matmul %1, %3, %cst {dimension_numbers = #tpu.dot_dimension_numbers<[1], [0], [0], [1], [0, 0, 1, 1], [], []>} : vector<8x40xbf16>, vector<40x128xbf16>, vector<8x128xf32> -> vector<8x128xf32>
    %c0_5 = arith.constant 0 : index
    %c1 = arith.constant 1 : index
    %c0_6 = arith.constant 0 : index
    %5 = vector.load %arg1[%c0_5, %c1, %c0_6] : memref<1x20x40xbf16, #tpu.memory_space<vmem>>, vector<1x8x40xbf16>
    %6 = vector.shape_cast %5 : vector<1x8x40xbf16> to vector<8x40xbf16>
    %c1_7 = arith.constant 1 : index
    %c0_8 = arith.constant 0 : index
    %c0_9 = arith.constant 0 : index
    %7 = vector.load %arg2[%c1_7, %c0_8, %c0_9] : memref<9x40x128xbf16, #tpu.memory_space<vmem>>, vector<1x40x128xbf16>
    %8 = vector.shape_cast %7 : vector<1x40x128xbf16> to vector<40x128xbf16>
    %cst_10 = arith.constant dense<0.000000e+00> : vector<8x128xf32>
    %9 = tpu.matmul %6, %8, %cst_10 {dimension_numbers = #tpu.dot_dimension_numbers<[1], [0], [0], [1], [0, 0, 1, 1], [], []>} : vector<8x40xbf16>, vector<40x128xbf16>, vector<8x128xf32> -> vector<8x128xf32>
    %10 = arith.addf %4, %9 : vector<8x128xf32>
    %c0_11 = arith.constant 0 : index
    %c2 = arith.constant 2 : index
    %c0_12 = arith.constant 0 : index
    %11 = vector.load %arg1[%c0_11, %c2, %c0_12] : memref<1x20x40xbf16, #tpu.memory_space<vmem>>, vector<1x8x40xbf16>
    %12 = vector.shape_cast %11 : vector<1x8x40xbf16> to vector<8x40xbf16>
    %c2_13 = arith.constant 2 : index
    %c0_14 = arith.constant 0 : index
    %c0_15 = arith.constant 0 : index
    %13 = vector.load %arg2[%c2_13, %c0_14, %c0_15] : memref<9x40x128xbf16, #tpu.memory_space<vmem>>, vector<1x40x128xbf16>
    %14 = vector.shape_cast %13 : vector<1x40x128xbf16> to vector<40x128xbf16>
    %cst_16 = arith.constant dense<0.000000e+00> : vector<8x128xf32>
    %15 = tpu.matmul %12, %14, %cst_16 {dimension_numbers = #tpu.dot_dimension_numbers<[1], [0], [0], [1], [0, 0, 1, 1], [], []>} : vector<8x40xbf16>, vector<40x128xbf16>, vector<8x128xf32> -> vector<8x128xf32>
    %16 = arith.addf %10, %15 : vector<8x128xf32>
    %c0_17 = arith.constant 0 : index
    %c4 = arith.constant 4 : index
    %c0_18 = arith.constant 0 : index
    %17 = vector.load %arg1[%c0_17, %c4, %c0_18] : memref<1x20x40xbf16, #tpu.memory_space<vmem>>, vector<1x8x40xbf16>
    %18 = vector.shape_cast %17 : vector<1x8x40xbf16> to vector<8x40xbf16>
    %c3 = arith.constant 3 : index
    %c0_19 = arith.constant 0 : index
    %c0_20 = arith.constant 0 : index
    %19 = vector.load %arg2[%c3, %c0_19, %c0_20] : memref<9x40x128xbf16, #tpu.memory_space<vmem>>, vector<1x40x128xbf16>
    %20 = vector.shape_cast %19 : vector<1x40x128xbf16> to vector<40x128xbf16>
    %cst_21 = arith.constant dense<0.000000e+00> : vector<8x128xf32>
    %21 = tpu.matmul %18, %20, %cst_21 {dimension_numbers = #tpu.dot_dimension_numbers<[1], [0], [0], [1], [0, 0, 1, 1], [], []>} : vector<8x40xbf16>, vector<40x128xbf16>, vector<8x128xf32> -> vector<8x128xf32>
    %22 = arith.addf %16, %21 : vector<8x128xf32>
    %c0_22 = arith.constant 0 : index
    %c5 = arith.constant 5 : index
    %c0_23 = arith.constant 0 : index
    %23 = vector.load %arg1[%c0_22, %c5, %c0_23] : memref<1x20x40xbf16, #tpu.memory_space<vmem>>, vector<1x8x40xbf16>
    %24 = vector.shape_cast %23 : vector<1x8x40xbf16> to vector<8x40xbf16>
    %c4_24 = arith.constant 4 : index
    %c0_25 = arith.constant 0 : index
    %c0_26 = arith.constant 0 : index
    %25 = vector.load %arg2[%c4_24, %c0_25, %c0_26] : memref<9x40x128xbf16, #tpu.memory_space<vmem>>, vector<1x40x128xbf16>
    %26 = vector.shape_cast %25 : vector<1x40x128xbf16> to vector<40x128xbf16>
    %cst_27 = arith.constant dense<0.000000e+00> : vector<8x128xf32>
    %27 = tpu.matmul %24, %26, %cst_27 {dimension_numbers = #tpu.dot_dimension_numbers<[1], [0], [0], [1], [0, 0, 1, 1], [], []>} : vector<8x40xbf16>, vector<40x128xbf16>, vector<8x128xf32> -> vector<8x128xf32>
    %28 = arith.addf %22, %27 : vector<8x128xf32>
    %c0_28 = arith.constant 0 : index
    %c6 = arith.constant 6 : index
    %c0_29 = arith.constant 0 : index
    %29 = vector.load %arg1[%c0_28, %c6, %c0_29] : memref<1x20x40xbf16, #tpu.memory_space<vmem>>, vector<1x8x40xbf16>
    %30 = vector.shape_cast %29 : vector<1x8x40xbf16> to vector<8x40xbf16>
    %c5_30 = arith.constant 5 : index
    %c0_31 = arith.constant 0 : index
    %c0_32 = arith.constant 0 : index
    %31 = vector.load %arg2[%c5_30, %c0_31, %c0_32] : memref<9x40x128xbf16, #tpu.memory_space<vmem>>, vector<1x40x128xbf16>
    %32 = vector.shape_cast %31 : vector<1x40x128xbf16> to vector<40x128xbf16>
    %cst_33 = arith.constant dense<0.000000e+00> : vector<8x128xf32>
    %33 = tpu.matmul %30, %32, %cst_33 {dimension_numbers = #tpu.dot_dimension_numbers<[1], [0], [0], [1], [0, 0, 1, 1], [], []>} : vector<8x40xbf16>, vector<40x128xbf16>, vector<8x128xf32> -> vector<8x128xf32>
    %34 = arith.addf %28, %33 : vector<8x128xf32>
    %c0_34 = arith.constant 0 : index
    %c8 = arith.constant 8 : index
    %c0_35 = arith.constant 0 : index
    %35 = vector.load %arg1[%c0_34, %c8, %c0_35] : memref<1x20x40xbf16, #tpu.memory_space<vmem>>, vector<1x8x40xbf16>
    %36 = vector.shape_cast %35 : vector<1x8x40xbf16> to vector<8x40xbf16>
    %c6_36 = arith.constant 6 : index
    %c0_37 = arith.constant 0 : index
    %c0_38 = arith.constant 0 : index
    %37 = vector.load %arg2[%c6_36, %c0_37, %c0_38] : memref<9x40x128xbf16, #tpu.memory_space<vmem>>, vector<1x40x128xbf16>
    %38 = vector.shape_cast %37 : vector<1x40x128xbf16> to vector<40x128xbf16>
    %cst_39 = arith.constant dense<0.000000e+00> : vector<8x128xf32>
    %39 = tpu.matmul %36, %38, %cst_39 {dimension_numbers = #tpu.dot_dimension_numbers<[1], [0], [0], [1], [0, 0, 1, 1], [], []>} : vector<8x40xbf16>, vector<40x128xbf16>, vector<8x128xf32> -> vector<8x128xf32>
    %40 = arith.addf %34, %39 : vector<8x128xf32>
    %c0_40 = arith.constant 0 : index
    %c9 = arith.constant 9 : index
    %c0_41 = arith.constant 0 : index
    %41 = vector.load %arg1[%c0_40, %c9, %c0_41] : memref<1x20x40xbf16, #tpu.memory_space<vmem>>, vector<1x8x40xbf16>
    %42 = vector.shape_cast %41 : vector<1x8x40xbf16> to vector<8x40xbf16>
    %c7 = arith.constant 7 : index
    %c0_42 = arith.constant 0 : index
    %c0_43 = arith.constant 0 : index
    %43 = vector.load %arg2[%c7, %c0_42, %c0_43] : memref<9x40x128xbf16, #tpu.memory_space<vmem>>, vector<1x40x128xbf16>
    %44 = vector.shape_cast %43 : vector<1x40x128xbf16> to vector<40x128xbf16>
    %cst_44 = arith.constant dense<0.000000e+00> : vector<8x128xf32>
    %45 = tpu.matmul %42, %44, %cst_44 {dimension_numbers = #tpu.dot_dimension_numbers<[1], [0], [0], [1], [0, 0, 1, 1], [], []>} : vector<8x40xbf16>, vector<40x128xbf16>, vector<8x128xf32> -> vector<8x128xf32>
    %46 = arith.addf %40, %45 : vector<8x128xf32>
    %c0_45 = arith.constant 0 : index
    %c10 = arith.constant 10 : index
    %c0_46 = arith.constant 0 : index
    %47 = vector.load %arg1[%c0_45, %c10, %c0_46] : memref<1x20x40xbf16, #tpu.memory_space<vmem>>, vector<1x8x40xbf16>
    %48 = vector.shape_cast %47 : vector<1x8x40xbf16> to vector<8x40xbf16>
    %c8_47 = arith.constant 8 : index
    %c0_48 = arith.constant 0 : index
    %c0_49 = arith.constant 0 : index
    %49 = vector.load %arg2[%c8_47, %c0_48, %c0_49] : memref<9x40x128xbf16, #tpu.memory_space<vmem>>, vector<1x40x128xbf16>
    %50 = vector.shape_cast %49 : vector<1x40x128xbf16> to vector<40x128xbf16>
    %cst_50 = arith.constant dense<0.000000e+00> : vector<8x128xf32>
    %51 = tpu.matmul %48, %50, %cst_50 {dimension_numbers = #tpu.dot_dimension_numbers<[1], [0], [0], [1], [0, 0, 1, 1], [], []>} : vector<8x40xbf16>, vector<40x128xbf16>, vector<8x128xf32> -> vector<8x128xf32>
    %52 = arith.addf %46, %51 : vector<8x128xf32>
    %c0_51 = arith.constant 0 : index
    %c0_52 = arith.constant 0 : index
    %53 = vector.load %arg3[%c0_51, %c0_52] : memref<1x128xf32, #tpu.memory_space<vmem>>, vector<1x128xf32>
    %54 = vector.broadcast %53 : vector<1x128xf32> to vector<8x128xf32>
    %55 = arith.mulf %52, %54 : vector<8x128xf32>
    %c0_53 = arith.constant 0 : index
    %c0_54 = arith.constant 0 : index
    %56 = vector.load %arg4[%c0_53, %c0_54] : memref<1x128xf32, #tpu.memory_space<vmem>>, vector<1x128xf32>
    %57 = vector.broadcast %56 : vector<1x128xf32> to vector<8x128xf32>
    %58 = arith.addf %55, %57 : vector<8x128xf32>
    %cst_55 = arith.constant 0.000000e+00 : f32
    %59 = vector.broadcast %cst_55 : f32 to vector<8x128xf32>
    %60 = arith.maximumf %58, %59 : vector<8x128xf32>
    %61 = arith.truncf %60 : vector<8x128xf32> to vector<8x128xbf16>
    %c0_56 = arith.constant 0 : index
    %c0_57 = arith.constant 0 : index
    %c0_58 = arith.constant 0 : index
    %62 = vector.load %arg5[%c0_56, %c0_57, %c0_58] : memref<1x8x128xbf16, #tpu.memory_space<vmem>>, vector<1x8x128xbf16>
    %63 = vector.shape_cast %62 : vector<1x8x128xbf16> to vector<8x128xbf16>
    %64 = vector.shape_cast %61 : vector<8x128xbf16> to vector<1x8x128xbf16>
    tpu.vector_store %arg5[%c0_56, %c0_57, %c0_58], %64 {strides = array<i32>} : memref<1x8x128xbf16, #tpu.memory_space<vmem>>, vector<1x8x128xbf16>,
    return
  }
  func.func @transform_0(%arg0: i32) -> (i32, i32, i32) {
    %c0_i32 = arith.constant 0 : i32
    %c0_i32_0 = arith.constant 0 : i32
    %c0_i32_1 = arith.constant 0 : i32
    return %arg0, %c0_i32, %c0_i32_0 : i32, i32, i32
  }
  func.func @transform_1(%arg0: i32) -> (i32, i32, i32) {
    %c0_i32 = arith.constant 0 : i32
    %c0_i32_0 = arith.constant 0 : i32
    %c0_i32_1 = arith.constant 0 : i32
    %c0_i32_2 = arith.constant 0 : i32
    return %c0_i32, %c0_i32_0, %c0_i32_1 : i32, i32, i32
  }
  func.func @transform_2(%arg0: i32) -> (i32, i32) {
    %c0_i32 = arith.constant 0 : i32
    %c0_i32_0 = arith.constant 0 : i32
    %c0_i32_1 = arith.constant 0 : i32
    return %c0_i32, %c0_i32_0 : i32, i32
  }
  func.func @transform_3(%arg0: i32) -> (i32, i32) {
    %c0_i32 = arith.constant 0 : i32
    %c0_i32_0 = arith.constant 0 : i32
    %c0_i32_1 = arith.constant 0 : i32
    return %c0_i32, %c0_i32_0 : i32, i32
  }
  func.func @transform_4(%arg0: i32) -> (i32, i32, i32) {
    %c0_i32 = arith.constant 0 : i32
    %c0_i32_0 = arith.constant 0 : i32
    %c0_i32_1 = arith.constant 0 : i32
    return %arg0, %c0_i32, %c0_i32_0 : i32, i32, i32
  }
}

</mosaic_0001>

<llo_original>
// kernel: tpu_custom_call.1
$region0: #{tpu_custom_call.1}
  #allocation0 [shape = 'u32[]', space=smem, size = 0x4, offset = 0x4, fixed_abs, tag = 'smem constant byte address 0x4 - core index']
  #allocation1 [shape = 'u32[144,128]{1,0:T(1,128)}', space=vmem, size = 0x12000, scoped, tag = 'internal scratch']
  %s0 = inlined_call_operand.vmem [shape: bf16[2,20,40], index: 0, kind: input, shape index: {}]
  %s1 = inlined_call_operand.hbm [shape: bf16[9,40,128], index: 1, kind: input, shape index: {}]
  %s2 = inlined_call_operand.vmem [shape: f32[1,128], index: 2, kind: input, shape index: {}]
  %s3 = inlined_call_operand.vmem [shape: f32[1,128], index: 3, kind: input, shape index: {}]
  %s4 = inlined_call_operand.hbm [shape: bf16[2,8,128], index: 4, kind: output, shape index: {}]
  %s5 = sld [smem:[#allocation0]]
  $region53: #{tpu_custom_call.1} parent=0
    _
  %s7 = ssub.s32 1, %s5
  %s8 = scalar_select 0, %s7, %s5
  $region1: #{tpu_custom_call.1} parent=0
    #allocation2 [shape = 'u8[92160]{0}', space=vmem, size = 0x16800, scoped, tag = 'input window, operand 1, single buffered']
    #allocation3 [shape = 's32[2]{0}', space=sflag, size = 0x8, scoped, tag = 'scoped memory for tpu_custom_call.1']
    #allocation4 [shape = 's32[2]{0}', space=sflag, size = 0x8, scoped, tag = 'scoped memory for tpu_custom_call.1']
    #allocation5 [shape = 'u8[4096]{0}', space=vmem, size = 0x1000, scoped, tag = 'output window, operand 0']
    %9 = vsyncpa [#allocation3], 0
    %10 = vsyncpa [#allocation4], 0
    %s11 = scalar_lea.sflag [#allocation4], 1
    %12 = vsyncpa %s11, 0
    loop: start=0, step=1, limit=4
    $region2: #{tpu_custom_call.1} parent=1 // loop_pre_header
      _
    $region3: #{tpu_custom_call.1} parent=1 // loop_header
      %s14 = sphi 0, %s18
      %p15 = scmp.ge.s32.totalorder %s14, 4
      %s24 = sphi 0, %s26
      %s27 = sphi 0, %s24
      %s28 = sphi 0, %s27
      %s44 = sphi 0, %s28
      %s48 = sphi 0, %s48
      %s50 = sphi 0, %s48
      %s51 = sphi 0, %s50
      %s65 = sphi 0, %s51
      %s69 = sphi 0, %s69
      %s71 = sphi 0, %s69
      %s72 = sphi 0, %s71
      %s86 = sphi 0, %s72
      %s90 = sphi 0, %s90
      %s92 = sphi 0, %s90
      %s93 = sphi 0, %s92
      %s107 = sphi 0, %s93
      %s113 = sphi 0, %s115
      %s116 = sphi 0, %s113
      %s117 = sphi 0, %s116
      %s133 = sphi 0, %s117
    $region4: #{tpu_custom_call.1} parent=1 // loop_header_branch
      %17 = sbr.rel (%p15) target = $region8
    $region5: #{tpu_custom_call.1} parent=1 // loop_body
      %s19 = ssub.s32 %s14, 1
      %s20 = ssub.s32 %s14, 2
      %s21 = sadd.s32 %s14, 1
      %s22 = ssub.s32 %s14, %s21
      %p23 = scmp.eq.s32.totalorder %s22, 0
      %s25 = sadd.s32 %s24, 1
      %s26 = scalar_select %p23, %s24, %s25
      %p29 = pneg %p23
      %p30 = scmp.eq.s32.totalorder %s14, 1
      %p31 = por %p29, %p30
      %p32 = scmp.ne.s32.totalorder %s24, %s27
      %p33 = scmp.eq.s32.totalorder %s14, 0
      %p34 = por %p32, %p33
      %p35 = scmp.ne.s32.totalorder %s24, %s27
      %p36 = scmp.eq.s32.totalorder %s19, 1
      %p37 = por %p35, %p36
      %p38 = scmp.ne.s32.totalorder %s27, %s28
      %p39 = scmp.eq.s32.totalorder %s19, 0
      %p40 = por %p38, %p39
      %p41 = scmp.ne.s32.totalorder %s27, %s28
      %p42 = scmp.eq.s32.totalorder %s20, 1
      %p43 = por %p41, %p42
      %p45 = scmp.ne.s32.totalorder %s28, %s44
      %p46 = scmp.eq.s32.totalorder %s20, 0
      %p47 = por %p45, %p46
      %s49 = sadd.s32 %s48, 1
      %p52 = scmp.eq.s32.totalorder %s14, 1
      %p53 = scmp.ne.s32.totalorder %s48, %s50
      %p54 = scmp.eq.s32.totalorder %s14, 0
      %p55 = por %p53, %p54
      %p56 = scmp.ne.s32.totalorder %s48, %s50
      %p57 = scmp.eq.s32.totalorder %s19, 1
      %p58 = por %p56, %p57
      %p59 = scmp.ne.s32.totalorder %s50, %s51
      %p60 = scmp.eq.s32.totalorder %s19, 0
      %p61 = por %p59, %p60
      %p62 = scmp.ne.s32.totalorder %s50, %s51
      %p63 = scmp.eq.s32.totalorder %s20, 1
      %p64 = por %p62, %p63
      %p66 = scmp.ne.s32.totalorder %s51, %s65
      %p67 = scmp.eq.s32.totalorder %s20, 0
      %p68 = por %p66, %p67
      %s70 = sadd.s32 %s69, 1
      %p73 = scmp.eq.s32.totalorder %s14, 1
      %p74 = scmp.ne.s32.totalorder %s69, %s71
      %p75 = scmp.eq.s32.totalorder %s14, 0
      %p76 = por %p74, %p75
      %p77 = scmp.ne.s32.totalorder %s69, %s71
      %p78 = scmp.eq.s32.totalorder %s19, 1
      %p79 = por %p77, %p78
      %p80 = scmp.ne.s32.totalorder %s71, %s72
      %p81 = scmp.eq.s32.totalorder %s19, 0
      %p82 = por %p80, %p81
      %p83 = scmp.ne.s32.totalorder %s71, %s72
      %p84 = scmp.eq.s32.totalorder %s20, 1
      %p85 = por %p83, %p84
      %p87 = scmp.ne.s32.totalorder %s72, %s86
      %p88 = scmp.eq.s32.totalorder %s20, 0
      %p89 = por %p87, %p88
      %s91 = sadd.s32 %s90, 1
      %p94 = scmp.eq.s32.totalorder %s14, 1
      %p95 = scmp.ne.s32.totalorder %s90, %s92
      %p96 = scmp.eq.s32.totalorder %s14, 0
      %p97 = por %p95, %p96
      %p98 = scmp.ne.s32.totalorder %s90, %s92
      %p99 = scmp.eq.s32.totalorder %s19, 1
      %p100 = por %p98, %p99
      %p101 = scmp.ne.s32.totalorder %s92, %s93
      %p102 = scmp.eq.s32.totalorder %s19, 0
      %p103 = por %p101, %p102
      %p104 = scmp.ne.s32.totalorder %s92, %s93
      %p105 = scmp.eq.s32.totalorder %s20, 1
      %p106 = por %p104, %p105
      %p108 = scmp.ne.s32.totalorder %s93, %s107
      %p109 = scmp.eq.s32.totalorder %s20, 0
      %p110 = por %p108, %p109
      %s111 = ssub.s32 %s14, %s21
      %p112 = scmp.eq.s32.totalorder %s111, 0
      %s114 = sadd.s32 %s113, 1
      %s115 = scalar_select %p112, %s113, %s114
      %p118 = pneg %p112
      %p119 = scmp.eq.s32.totalorder %s14, 1
      %p120 = por %p118, %p119
      %p121 = scmp.ne.s32.totalorder %s113, %s116
      %p122 = scmp.eq.s32.totalorder %s14, 0
      %p123 = por %p121, %p122
      %p124 = scmp.ne.s32.totalorder %s113, %s116
      %p125 = scmp.eq.s32.totalorder %s19, 1
      %p126 = por %p124, %p125
      %p127 = scmp.ne.s32.totalorder %s116, %s117
      %p128 = scmp.eq.s32.totalorder %s19, 0
      %p129 = por %p127, %p128
      %p130 = scmp.ne.s32.totalorder %s116, %s117
      %p131 = scmp.eq.s32.totalorder %s20, 1
      %p132 = por %p130, %p131
      %p134 = scmp.ne.s32.totalorder %s117, %s133
      %p135 = scmp.eq.s32.totalorder %s20, 0
      %p136 = por %p134, %p135
      %p137 = scmp.le.s32.totalorder 1, %s14
      %p138 = scmp.lt.s32.totalorder %s14, 3
      %p139 = pnand %p137, %p138
      %p140 = pneg %p139
      // Predicated region
      $region9: #{tpu_custom_call.1} parent=5 // pred_check
        _
      $region10: #{tpu_custom_call.1} parent=5 // pred_check_branch
        %142 = sbr.rel (%p139) target = $region12
      $region11: #{tpu_custom_call.1} parent=5 // pred_region
        %s143 = ssub.s32 %s14, 1
        // Predicated region
        $region13: #{tpu_custom_call.1} parent=11 // pred_check
          %p144 = pneg %p61
        $region14: #{tpu_custom_call.1} parent=11 // pred_check_branch
          %146 = sbr.rel (%p144) target = $region16
        $region15: #{tpu_custom_call.1} parent=11 // pred_region
          %s148 = ssub.s32 2880, 2880
          %149 = vsyncadd [#allocation3], %s148
          %s150 = sshll.u32 [#allocation2], 4
          %s151 = int_to_ptr.vmem [resolvable:$true] %s150
          %156 = dma.hbm_to_vmem [thread:$0]  %s1, 2880, %s151, [#allocation3], 64, 64, 4
        $region16: #{tpu_custom_call.1} parent=11 // pred_fallthru
          _
        // Predicated region
        $region17: #{tpu_custom_call.1} parent=11 // pred_check
          %p157 = pneg %p82
        $region18: #{tpu_custom_call.1} parent=11 // pred_check_branch
          %159 = sbr.rel (%p157) target = $region20
        $region19: #{tpu_custom_call.1} parent=11 // pred_region
          _
        $region20: #{tpu_custom_call.1} parent=11 // pred_fallthru
          _
        // Predicated region
        $region21: #{tpu_custom_call.1} parent=11 // pred_check
          %p160 = pneg %p103
        $region22: #{tpu_custom_call.1} parent=11 // pred_check_branch
          %162 = sbr.rel (%p160) target = $region24
        $region23: #{tpu_custom_call.1} parent=11 // pred_region
          _
        $region24: #{tpu_custom_call.1} parent=11 // pred_fallthru
          _
      $region12: #{tpu_custom_call.1} parent=5 // pred_fallthru
        _
      %p163 = scmp.lt.s32.totalorder %s14, 2
      // Predicated region
      $region25: #{tpu_custom_call.1} parent=5 // pred_check
        %p164 = pneg %p163
      $region26: #{tpu_custom_call.1} parent=5 // pred_check_branch
        %166 = sbr.rel (%p164) target = $region28
      $region27: #{tpu_custom_call.1} parent=5 // pred_region
        // Predicated region
        $region29: #{tpu_custom_call.1} parent=27 // pred_check
          %p167 = pneg %p34
        $region30: #{tpu_custom_call.1} parent=27 // pred_check_branch
          %169 = sbr.rel (%p167) target = $region32
        $region31: #{tpu_custom_call.1} parent=27 // pred_region
          %p170 = scmp.lt.s32.totalorder %s14, 1
          %s171 = scalar_select %p170, %s14, 1
          %s172 = smul.addr %s171, 3
          %s173 = smul.addr %s172, 4
          %s174 = scalar_lea.vmem %s0, %s173
        $region32: #{tpu_custom_call.1} parent=27 // pred_fallthru
          _
      $region28: #{tpu_custom_call.1} parent=5 // pred_fallthru
        _
      %p175 = scmp.le.s32.totalorder 1, %s14
      %p176 = scmp.lt.s32.totalorder %s14, 3
      %p177 = pnand %p175, %p176
      %p178 = pneg %p177
      // Predicated region
      $region33: #{tpu_custom_call.1} parent=5 // pred_check
        _
      $region34: #{tpu_custom_call.1} parent=5 // pred_check_branch
        %180 = sbr.rel (%p177) target = $region36
      $region35: #{tpu_custom_call.1} parent=5 // pred_region
        %s181 = ssub.s32 %s14, 1
        // Predicated region
        $region37: #{tpu_custom_call.1} parent=35 // pred_check
          %p182 = pneg %p61
        $region38: #{tpu_custom_call.1} parent=35 // pred_check_branch
          %184 = sbr.rel (%p182) target = $region40
        $region39: #{tpu_custom_call.1} parent=35 // pred_region
          %185 = dma.done [#allocation3], 2880
        $region40: #{tpu_custom_call.1} parent=35 // pred_fallthru
          _
        %p186 = scmp.lt.s32.totalorder %s19, 1
        %s187 = scalar_select %p186, %s19, 1
        %s188 = smul.addr %s187, 3
        %s189 = smul.addr %s188, 4
        %s190 = scalar_lea.vmem %s0, %s189
        %p191 = pneg %p40
        %p192 = pneg %p37
        %p193 = pneg %p61
        %p194 = pneg %p58
        %p195 = pneg %p82
        %p196 = pneg %p79
        %p197 = pneg %p103
        %p198 = pneg %p100
        %p199 = pneg %p129
        %p200 = pneg %p126
        %s201 = sand.u32 %s116, 1
        %s202 = scalar_lea.sflag [#allocation4], %s201
        %s203 = sand.u32 %s116, 1
        %s204 = smul.addr %s203, 4
        %s205 = scalar_lea.vmem [#allocation5], %s204
        %p206 = scmp.lt.s32.totalorder %s19, 1
        %s207 = scalar_select %p206, %s19, 1
        %s208 = smul.addr %s207, 3
        %s209 = smul.addr %s208, 4
        %s210 = scalar_lea.vmem %s0, %s209
        %v212 = vld [vmem:[%s210] sm:$0xf]
        %v213 = vld [vmem:[#allocation2] sm:$0xf]
        %v214 = vld [vmem:[#allocation2 + $0x4] sm:$0xf]
        %v215 = vld [vmem:[#allocation2 + $0x8] sm:$0xf]
        %v216 = vld [vmem:[#allocation2 + $0xc] sm:$0xf]
        %v217 = vld [vmem:[#allocation2 + $0x10] sm:$0xf]
        %v218 = vld [vmem:[%s210 + $0x4] sm:$0x1]
        %s219 = scalar_lea.vmem [#allocation2], 20
        %v220 = vld [vmem:[%s219] sm:$0xf]
        %v221 = vld [vmem:[%s219 + $0x4] sm:$0xf]
        %v222 = vld [vmem:[%s219 + $0x8] sm:$0xf]
        %v223 = vld [vmem:[%s219 + $0xc] sm:$0xf]
        %v224 = vld [vmem:[%s219 + $0x10] sm:$0xf]
        %v227 = vunpack.c.l.b16 %v212
        %v228 = vunpack.c.l.b16 %v218
        %v229 = vpack.c.b16 %v228, %v227
        %v231 = vshrl.u32 %v229, 16
        %v233 = vshll.u32 %v229, 16
        %v235 = vrot.slane %v233, 1
        %v236 = vor.u32 %v231, %v235
        %v242 = vunpack.c.l.b16 %v220
        %v243 = vunpack.c.l.b16 %v221
        %v244 = vunpack.c.l.b16 %v222
        %v245 = vunpack.c.l.b16 %v223
        %v246 = vunpack.c.l.b16 %v224
        %v247 = vpack.c.b16 %v243, %v242
        %v248 = vpack.c.b16 %v245, %v244
        %v249 = vpack.c.b16 %v246, %v246
        %vm252 = vcmask 326656
        %v254 = vsel %vm252, %v236, 0
        %vm256 = vcmask 1043456
        %v258 = vsel %vm256, %v249, 0
        %260 = vmatprep.subr.bf16.mxu0 0
        %261 = vmatpush1.bf16.msra.mxu0 %v247
        %262 = vmatprep.subr.bf16.mxu0 0
        %263 = vmatpush1.bf16.msra.mxu0 %v248
        %264 = vmatprep.subr.bf16.mxu0 0
        %265 = vmatpush1.bf16.msra.mxu0 %v258
        %266 = vmatprep.subr.bf16.mxu0 0
        %267 = vmatpush1.bf16.msra.mxu0 0
        %268 = vmatprep.subr.bf16.mxu0 0
        %269 = vmatpush1.bf16.msra.mxu0 0
        %270 = vmatprep.subr.bf16.mxu0 0
        %271 = vmatpush1.bf16.msra.mxu0 0
        %272 = vmatprep.subr.bf16.mxu0 0
        %273 = vmatpush1.bf16.msra.mxu0 0
        %274 = vmatprep.subr.bf16.mxu0 0
        %275 = vmatpush1.bf16.msra.mxu0 0
        %276 = vmatprep.subr.bf16.mxu0 0
        %277 = vmatpush1.bf16.msra.mxu0 0
        %278 = vmatprep.subr.bf16.mxu0 0
        %279 = vmatpush1.bf16.msra.mxu0 0
        %280 = vmatprep.subr.bf16.mxu0 0
        %281 = vmatpush1.bf16.msra.mxu0 0
        %282 = vmatprep.subr.bf16.mxu0 0
        %283 = vmatpush1.bf16.msra.mxu0 0
        %284 = vmatprep.subr.bf16.mxu0 0
        %285 = vmatpush1.bf16.msra.mxu0 0
        %286 = vmatprep.subr.bf16.mxu0 0
        %287 = vmatpush1.bf16.msra.mxu0 0
        %288 = vmatprep.subr.bf16.mxu0 0
        %289 = vmatpush1.bf16.msra.mxu0 0
        %290 = vmatprep.subr.bf16.mxu0 0
        %291 = vmatpush1.bf16.msra.mxu0 0
        %292 = vmatprep.mubr.bf16.mxu0 0
        %293 = vmatmul.mubr.bf16.gmra.mrb[0].mxu0 %v254
        %v294 = vpop.f32.mrb[0].mxu0
        %v295 = vadd.f32 0.0, %v294
        %v296 = vpop.f32.mrb[0].mxu0
        %v297 = vpop.f32.mrb[0].mxu0
        %v298 = vpop.f32.mrb[0].mxu0
        %299 = vdwg.mxu0
        %v305 = vunpack.c.l.b16 %v213
        %v306 = vunpack.c.l.b16 %v214
        %v307 = vunpack.c.l.b16 %v215
        %v308 = vunpack.c.l.b16 %v216
        %v309 = vunpack.c.l.b16 %v217
        %v310 = vpack.c.b16 %v306, %v305
        %v311 = vpack.c.b16 %v308, %v307
        %v312 = vpack.c.b16 %v309, %v309
        %v316 = vsel %vm252, %v212, 0
        %v319 = vsel %vm256, %v312, 0
        %321 = vmatprep.subr.bf16.mxu0 0
        %322 = vmatpush1.bf16.msra.mxu0 %v310
        %323 = vmatprep.subr.bf16.mxu0 0
        %324 = vmatpush1.bf16.msra.mxu0 %v311
        %325 = vmatprep.subr.bf16.mxu0 0
        %326 = vmatpush1.bf16.msra.mxu0 %v319
        %327 = vmatprep.subr.bf16.mxu0 0
        %328 = vmatpush1.bf16.msra.mxu0 0
        %329 = vmatprep.subr.bf16.mxu0 0
        %330 = vmatpush1.bf16.msra.mxu0 0
        %331 = vmatprep.subr.bf16.mxu0 0
        %332 = vmatpush1.bf16.msra.mxu0 0
        %333 = vmatprep.subr.bf16.mxu0 0
        %334 = vmatpush1.bf16.msra.mxu0 0
        %335 = vmatprep.subr.bf16.mxu0 0
        %336 = vmatpush1.bf16.msra.mxu0 0
        %337 = vmatprep.subr.bf16.mxu0 0
        %338 = vmatpush1.bf16.msra.mxu0 0
        %339 = vmatprep.subr.bf16.mxu0 0
        %340 = vmatpush1.bf16.msra.mxu0 0
        %341 = vmatprep.subr.bf16.mxu0 0
        %342 = vmatpush1.bf16.msra.mxu0 0
        %343 = vmatprep.subr.bf16.mxu0 0
        %344 = vmatpush1.bf16.msra.mxu0 0
        %345 = vmatprep.subr.bf16.mxu0 0
        %346 = vmatpush1.bf16.msra.mxu0 0
        %347 = vmatprep.subr.bf16.mxu0 0
        %348 = vmatpush1.bf16.msra.mxu0 0
        %349 = vmatprep.subr.bf16.mxu0 0
        %350 = vmatpush1.bf16.msra.mxu0 0
        %351 = vmatprep.subr.bf16.mxu0 0
        %352 = vmatpush1.bf16.msra.mxu0 0
        %353 = vmatprep.mubr.bf16.mxu0 0
        %354 = vmatmul.mubr.bf16.gmra.mrb[0].mxu0 %v316
        %v355 = vpop.f32.mrb[0].mxu0
        %v356 = vadd.f32 %v295, %v355
        %v357 = vpop.f32.mrb[0].mxu0
        %v358 = vpop.f32.mrb[0].mxu0
        %v359 = vpop.f32.mrb[0].mxu0
        %360 = vdwg.mxu0
        %v361 = vld [vmem:[%s210] sm:$0xe]
        %s362 = scalar_lea.vmem [#allocation2], 40
        %v363 = vld [vmem:[%s362] sm:$0xf]
        %v364 = vld [vmem:[%s362 + $0x4] sm:$0xf]
        %v365 = vld [vmem:[%s362 + $0x8] sm:$0xf]
        %v366 = vld [vmem:[%s362 + $0xc] sm:$0xf]
        %v367 = vld [vmem:[%s362 + $0x10] sm:$0xf]
        %v369 = vunpack.c.l.b16 %v361
        %v370 = vpack.c.b16 %v228, %v369
        %v371 = vrot.slane %v370, 1
        %v377 = vunpack.c.l.b16 %v363
        %v378 = vunpack.c.l.b16 %v364
        %v379 = vunpack.c.l.b16 %v365
        %v380 = vunpack.c.l.b16 %v366
        %v381 = vunpack.c.l.b16 %v367
        %v382 = vpack.c.b16 %v378, %v377
        %v383 = vpack.c.b16 %v380, %v379
        %v384 = vpack.c.b16 %v381, %v381
        %v388 = vsel %vm252, %v371, 0
        %v391 = vsel %vm256, %v384, 0
        %393 = vmatprep.subr.bf16.mxu0 0
        %394 = vmatpush1.bf16.msra.mxu0 %v382
        %395 = vmatprep.subr.bf16.mxu0 0
        %396 = vmatpush1.bf16.msra.mxu0 %v383
        %397 = vmatprep.subr.bf16.mxu0 0
        %398 = vmatpush1.bf16.msra.mxu0 %v391
        %399 = vmatprep.subr.bf16.mxu0 0
        %400 = vmatpush1.bf16.msra.mxu0 0
        %401 = vmatprep.subr.bf16.mxu0 0
        %402 = vmatpush1.bf16.msra.mxu0 0
        %403 = vmatprep.subr.bf16.mxu0 0
        %404 = vmatpush1.bf16.msra.mxu0 0
        %405 = vmatprep.subr.bf16.mxu0 0
        %406 = vmatpush1.bf16.msra.mxu0 0
        %407 = vmatprep.subr.bf16.mxu0 0
        %408 = vmatpush1.bf16.msra.mxu0 0
        %409 = vmatprep.subr.bf16.mxu0 0
        %410 = vmatpush1.bf16.msra.mxu0 0
        %411 = vmatprep.subr.bf16.mxu0 0
        %412 = vmatpush1.bf16.msra.mxu0 0
        %413 = vmatprep.subr.bf16.mxu0 0
        %414 = vmatpush1.bf16.msra.mxu0 0
        %415 = vmatprep.subr.bf16.mxu0 0
        %416 = vmatpush1.bf16.msra.mxu0 0
        %417 = vmatprep.subr.bf16.mxu0 0
        %418 = vmatpush1.bf16.msra.mxu0 0
        %419 = vmatprep.subr.bf16.mxu0 0
        %420 = vmatpush1.bf16.msra.mxu0 0
        %421 = vmatprep.subr.bf16.mxu0 0
        %422 = vmatpush1.bf16.msra.mxu0 0
        %423 = vmatprep.subr.bf16.mxu0 0
        %424 = vmatpush1.bf16.msra.mxu0 0
        %425 = vmatprep.mubr.bf16.mxu0 0
        %426 = vmatmul.mubr.bf16.gmra.mrb[0].mxu0 %v388
        %v427 = vpop.f32.mrb[0].mxu0
        %v428 = vadd.f32 0.0, %v427
        %v429 = vpop.f32.mrb[0].mxu0
        %v430 = vpop.f32.mrb[0].mxu0
        %v431 = vpop.f32.mrb[0].mxu0
        %432 = vdwg.mxu0
        %v433 = vadd.f32 %v356, %v428
        %v434 = vld [vmem:[%s210] sm:$0xc]
        %v435 = vld [vmem:[%s210 + $0x4] sm:$0x3]
        %s436 = scalar_lea.vmem [#allocation2], 60
        %v437 = vld [vmem:[%s436] sm:$0xf]
        %v438 = vld [vmem:[%s436 + $0x4] sm:$0xf]
        %v439 = vld [vmem:[%s436 + $0x8] sm:$0xf]
        %v440 = vld [vmem:[%s436 + $0xc] sm:$0xf]
        %v441 = vld [vmem:[%s436 + $0x10] sm:$0xf]
        %v444 = vunpack.c.l.b16 %v434
        %v445 = vunpack.c.l.b16 %v435
        %v446 = vpack.c.b16 %v445, %v444
        %v447 = vrot.slane %v446, 2
        %v453 = vunpack.c.l.b16 %v437
        %v454 = vunpack.c.l.b16 %v438
        %v455 = vunpack.c.l.b16 %v439
        %v456 = vunpack.c.l.b16 %v440
        %v457 = vunpack.c.l.b16 %v441
        %v458 = vpack.c.b16 %v454, %v453
        %v459 = vpack.c.b16 %v456, %v455
        %v460 = vpack.c.b16 %v457, %v457
        %v464 = vsel %vm252, %v447, 0
        %v467 = vsel %vm256, %v460, 0
        %469 = vmatprep.subr.bf16.mxu0 0
        %470 = vmatpush1.bf16.msra.mxu0 %v458
        %471 = vmatprep.subr.bf16.mxu0 0
        %472 = vmatpush1.bf16.msra.mxu0 %v459
        %473 = vmatprep.subr.bf16.mxu0 0
        %474 = vmatpush1.bf16.msra.mxu0 %v467
        %475 = vmatprep.subr.bf16.mxu0 0
        %476 = vmatpush1.bf16.msra.mxu0 0
        %477 = vmatprep.subr.bf16.mxu0 0
        %478 = vmatpush1.bf16.msra.mxu0 0
        %479 = vmatprep.subr.bf16.mxu0 0
        %480 = vmatpush1.bf16.msra.mxu0 0
        %481 = vmatprep.subr.bf16.mxu0 0
        %482 = vmatpush1.bf16.msra.mxu0 0
        %483 = vmatprep.subr.bf16.mxu0 0
        %484 = vmatpush1.bf16.msra.mxu0 0
        %485 = vmatprep.subr.bf16.mxu0 0
        %486 = vmatpush1.bf16.msra.mxu0 0
        %487 = vmatprep.subr.bf16.mxu0 0
        %488 = vmatpush1.bf16.msra.mxu0 0
        %489 = vmatprep.subr.bf16.mxu0 0
        %490 = vmatpush1.bf16.msra.mxu0 0
        %491 = vmatprep.subr.bf16.mxu0 0
        %492 = vmatpush1.bf16.msra.mxu0 0
        %493 = vmatprep.subr.bf16.mxu0 0
        %494 = vmatpush1.bf16.msra.mxu0 0
        %495 = vmatprep.subr.bf16.mxu0 0
        %496 = vmatpush1.bf16.msra.mxu0 0
        %497 = vmatprep.subr.bf16.mxu0 0
        %498 = vmatpush1.bf16.msra.mxu0 0
        %499 = vmatprep.subr.bf16.mxu0 0
        %500 = vmatpush1.bf16.msra.mxu0 0
        %501 = vmatprep.mubr.bf16.mxu0 0
        %502 = vmatmul.mubr.bf16.gmra.mrb[0].mxu0 %v464
        %v503 = vpop.f32.mrb[0].mxu0
        %v504 = vadd.f32 0.0, %v503
        %v505 = vpop.f32.mrb[0].mxu0
        %v506 = vpop.f32.mrb[0].mxu0
        %v507 = vpop.f32.mrb[0].mxu0
        %508 = vdwg.mxu0
        %v509 = vadd.f32 %v433, %v504
        %v510 = vld [vmem:[%s210 + $0x4] sm:$0x7]
        %s511 = scalar_lea.vmem [#allocation2], 80
        %v512 = vld [vmem:[%s511] sm:$0xf]
        %v513 = vld [vmem:[%s511 + $0x4] sm:$0xf]
        %v514 = vld [vmem:[%s511 + $0x8] sm:$0xf]
        %v515 = vld [vmem:[%s511 + $0xc] sm:$0xf]
        %v516 = vld [vmem:[%s511 + $0x10] sm:$0xf]
        %v518 = vunpack.c.l.b16 %v510
        %v519 = vpack.c.b16 %v518, %v444
        %v521 = vshrl.u32 %v519, 16
        %v523 = vrot.slane %v521, 2
        %v524 = vshll.u32 %v519, 16
        %v526 = vrot.slane %v524, 3
        %v527 = vor.u32 %v523, %v526
        %v533 = vunpack.c.l.b16 %v512
        %v534 = vunpack.c.l.b16 %v513
        %v535 = vunpack.c.l.b16 %v514
        %v536 = vunpack.c.l.b16 %v515
        %v537 = vunpack.c.l.b16 %v516
        %v538 = vpack.c.b16 %v534, %v533
        %v539 = vpack.c.b16 %v536, %v535
        %v540 = vpack.c.b16 %v537, %v537
        %v544 = vsel %vm252, %v527, 0
        %v547 = vsel %vm256, %v540, 0
        %549 = vmatprep.subr.bf16.mxu0 0
        %550 = vmatpush1.bf16.msra.mxu0 %v538
        %551 = vmatprep.subr.bf16.mxu0 0
        %552 = vmatpush1.bf16.msra.mxu0 %v539
        %553 = vmatprep.subr.bf16.mxu0 0
        %554 = vmatpush1.bf16.msra.mxu0 %v547
        %555 = vmatprep.subr.bf16.mxu0 0
        %556 = vmatpush1.bf16.msra.mxu0 0
        %557 = vmatprep.subr.bf16.mxu0 0
        %558 = vmatpush1.bf16.msra.mxu0 0
        %559 = vmatprep.subr.bf16.mxu0 0
        %560 = vmatpush1.bf16.msra.mxu0 0
        %561 = vmatprep.subr.bf16.mxu0 0
        %562 = vmatpush1.bf16.msra.mxu0 0
        %563 = vmatprep.subr.bf16.mxu0 0
        %564 = vmatpush1.bf16.msra.mxu0 0
        %565 = vmatprep.subr.bf16.mxu0 0
        %566 = vmatpush1.bf16.msra.mxu0 0
        %567 = vmatprep.subr.bf16.mxu0 0
        %568 = vmatpush1.bf16.msra.mxu0 0
        %569 = vmatprep.subr.bf16.mxu0 0
        %570 = vmatpush1.bf16.msra.mxu0 0
        %571 = vmatprep.subr.bf16.mxu0 0
        %572 = vmatpush1.bf16.msra.mxu0 0
        %573 = vmatprep.subr.bf16.mxu0 0
        %574 = vmatpush1.bf16.msra.mxu0 0
        %575 = vmatprep.subr.bf16.mxu0 0
        %576 = vmatpush1.bf16.msra.mxu0 0
        %577 = vmatprep.subr.bf16.mxu0 0
        %578 = vmatpush1.bf16.msra.mxu0 0
        %579 = vmatprep.subr.bf16.mxu0 0
        %580 = vmatpush1.bf16.msra.mxu0 0
        %581 = vmatprep.mubr.bf16.mxu0 0
        %582 = vmatmul.mubr.bf16.gmra.mrb[0].mxu0 %v544
        %v583 = vpop.f32.mrb[0].mxu0
        %v584 = vadd.f32 0.0, %v583
        %v585 = vpop.f32.mrb[0].mxu0
        %v586 = vpop.f32.mrb[0].mxu0
        %v587 = vpop.f32.mrb[0].mxu0
        %588 = vdwg.mxu0
        %v589 = vadd.f32 %v509, %v584
        %v590 = vld [vmem:[%s210] sm:$0x8]
        %s591 = scalar_lea.vmem [#allocation2], 100
        %v592 = vld [vmem:[%s591] sm:$0xf]
        %v593 = vld [vmem:[%s591 + $0x4] sm:$0xf]
        %v594 = vld [vmem:[%s591 + $0x8] sm:$0xf]
        %v595 = vld [vmem:[%s591 + $0xc] sm:$0xf]
        %v596 = vld [vmem:[%s591 + $0x10] sm:$0xf]
        %v598 = vunpack.c.l.b16 %v590
        %v599 = vpack.c.b16 %v518, %v598
        %v600 = vrot.slane %v599, 3
        %v606 = vunpack.c.l.b16 %v592
        %v607 = vunpack.c.l.b16 %v593
        %v608 = vunpack.c.l.b16 %v594
        %v609 = vunpack.c.l.b16 %v595
        %v610 = vunpack.c.l.b16 %v596
        %v611 = vpack.c.b16 %v607, %v606
        %v612 = vpack.c.b16 %v609, %v608
        %v613 = vpack.c.b16 %v610, %v610
        %v617 = vsel %vm252, %v600, 0
        %v620 = vsel %vm256, %v613, 0
        %622 = vmatprep.subr.bf16.mxu0 0
        %623 = vmatpush1.bf16.msra.mxu0 %v611
        %624 = vmatprep.subr.bf16.mxu0 0
        %625 = vmatpush1.bf16.msra.mxu0 %v612
        %626 = vmatprep.subr.bf16.mxu0 0
        %627 = vmatpush1.bf16.msra.mxu0 %v620
        %628 = vmatprep.subr.bf16.mxu0 0
        %629 = vmatpush1.bf16.msra.mxu0 0
        %630 = vmatprep.subr.bf16.mxu0 0
        %631 = vmatpush1.bf16.msra.mxu0 0
        %632 = vmatprep.subr.bf16.mxu0 0
        %633 = vmatpush1.bf16.msra.mxu0 0
        %634 = vmatprep.subr.bf16.mxu0 0
        %635 = vmatpush1.bf16.msra.mxu0 0
        %636 = vmatprep.subr.bf16.mxu0 0
        %637 = vmatpush1.bf16.msra.mxu0 0
        %638 = vmatprep.subr.bf16.mxu0 0
        %639 = vmatpush1.bf16.msra.mxu0 0
        %640 = vmatprep.subr.bf16.mxu0 0
        %641 = vmatpush1.bf16.msra.mxu0 0
        %642 = vmatprep.subr.bf16.mxu0 0
        %643 = vmatpush1.bf16.msra.mxu0 0
        %644 = vmatprep.subr.bf16.mxu0 0
        %645 = vmatpush1.bf16.msra.mxu0 0
        %646 = vmatprep.subr.bf16.mxu0 0
        %647 = vmatpush1.bf16.msra.mxu0 0
        %648 = vmatprep.subr.bf16.mxu0 0
        %649 = vmatpush1.bf16.msra.mxu0 0
        %650 = vmatprep.subr.bf16.mxu0 0
        %651 = vmatpush1.bf16.msra.mxu0 0
        %652 = vmatprep.subr.bf16.mxu0 0
        %653 = vmatpush1.bf16.msra.mxu0 0
        %654 = vmatprep.mubr.bf16.mxu0 0
        %655 = vmatmul.mubr.bf16.gmra.mrb[0].mxu0 %v617
        %v656 = vpop.f32.mrb[0].mxu0
        %v657 = vadd.f32 0.0, %v656
        %v658 = vpop.f32.mrb[0].mxu0
        %v659 = vpop.f32.mrb[0].mxu0
        %v660 = vpop.f32.mrb[0].mxu0
        %661 = vdwg.mxu0
        %v662 = vadd.f32 %v589, %v657
        %v663 = vld [vmem:[%s210 + $0x4] sm:$0xf]
        %s664 = scalar_lea.vmem [#allocation2], 120
        %v665 = vld [vmem:[%s664] sm:$0xf]
        %v666 = vld [vmem:[%s664 + $0x4] sm:$0xf]
        %v667 = vld [vmem:[%s664 + $0x8] sm:$0xf]
        %v668 = vld [vmem:[%s664 + $0xc] sm:$0xf]
        %v669 = vld [vmem:[%s664 + $0x10] sm:$0xf]
        %v675 = vunpack.c.l.b16 %v665
        %v676 = vunpack.c.l.b16 %v666
        %v677 = vunpack.c.l.b16 %v667
        %v678 = vunpack.c.l.b16 %v668
        %v679 = vunpack.c.l.b16 %v669
        %v680 = vpack.c.b16 %v676, %v675
        %v681 = vpack.c.b16 %v678, %v677
        %v682 = vpack.c.b16 %v679, %v679
        %v686 = vsel %vm252, %v663, 0
        %v689 = vsel %vm256, %v682, 0
        %691 = vmatprep.subr.bf16.mxu0 0
        %692 = vmatpush1.bf16.msra.mxu0 %v680
        %693 = vmatprep.subr.bf16.mxu0 0
        %694 = vmatpush1.bf16.msra.mxu0 %v681
        %695 = vmatprep.subr.bf16.mxu0 0
        %696 = vmatpush1.bf16.msra.mxu0 %v689
        %697 = vmatprep.subr.bf16.mxu0 0
        %698 = vmatpush1.bf16.msra.mxu0 0
        %699 = vmatprep.subr.bf16.mxu0 0
        %700 = vmatpush1.bf16.msra.mxu0 0
        %701 = vmatprep.subr.bf16.mxu0 0
        %702 = vmatpush1.bf16.msra.mxu0 0
        %703 = vmatprep.subr.bf16.mxu0 0
        %704 = vmatpush1.bf16.msra.mxu0 0
        %705 = vmatprep.subr.bf16.mxu0 0
        %706 = vmatpush1.bf16.msra.mxu0 0
        %707 = vmatprep.subr.bf16.mxu0 0
        %708 = vmatpush1.bf16.msra.mxu0 0
        %709 = vmatprep.subr.bf16.mxu0 0
        %710 = vmatpush1.bf16.msra.mxu0 0
        %711 = vmatprep.subr.bf16.mxu0 0
        %712 = vmatpush1.bf16.msra.mxu0 0
        %713 = vmatprep.subr.bf16.mxu0 0
        %714 = vmatpush1.bf16.msra.mxu0 0
        %715 = vmatprep.subr.bf16.mxu0 0
        %716 = vmatpush1.bf16.msra.mxu0 0
        %717 = vmatprep.subr.bf16.mxu0 0
        %718 = vmatpush1.bf16.msra.mxu0 0
        %719 = vmatprep.subr.bf16.mxu0 0
        %720 = vmatpush1.bf16.msra.mxu0 0
        %721 = vmatprep.subr.bf16.mxu0 0
        %722 = vmatpush1.bf16.msra.mxu0 0
        %723 = vmatprep.mubr.bf16.mxu0 0
        %724 = vmatmul.mubr.bf16.gmra.mrb[0].mxu0 %v686
        %v725 = vpop.f32.mrb[0].mxu0
        %v726 = vadd.f32 0.0, %v725
        %v727 = vpop.f32.mrb[0].mxu0
        %v728 = vpop.f32.mrb[0].mxu0
        %v729 = vpop.f32.mrb[0].mxu0
        %730 = vdwg.mxu0
        %v731 = vadd.f32 %v662, %v726
        %v732 = vld [vmem:[%s210 + $0x4] sm:$0xf]
        %v733 = vld [vmem:[%s210 + $0x8] sm:$0x1]
        %s734 = scalar_lea.vmem [#allocation2], 140
        %v735 = vld [vmem:[%s734] sm:$0xf]
        %v736 = vld [vmem:[%s734 + $0x4] sm:$0xf]
        %v737 = vld [vmem:[%s734 + $0x8] sm:$0xf]
        %v738 = vld [vmem:[%s734 + $0xc] sm:$0xf]
        %v739 = vld [vmem:[%s734 + $0x10] sm:$0xf]
        %v742 = vunpack.c.l.b16 %v732
        %v743 = vunpack.c.l.b16 %v733
        %v744 = vpack.c.b16 %v743, %v742
        %v746 = vshrl.u32 %v744, 16
        %v748 = vshll.u32 %v744, 16
        %v750 = vrot.slane %v748, 1
        %v751 = vor.u32 %v746, %v750
        %v757 = vunpack.c.l.b16 %v735
        %v758 = vunpack.c.l.b16 %v736
        %v759 = vunpack.c.l.b16 %v737
        %v760 = vunpack.c.l.b16 %v738
        %v761 = vunpack.c.l.b16 %v739
        %v762 = vpack.c.b16 %v758, %v757
        %v763 = vpack.c.b16 %v760, %v759
        %v764 = vpack.c.b16 %v761, %v761
        %v768 = vsel %vm252, %v751, 0
        %v771 = vsel %vm256, %v764, 0
        %773 = vmatprep.subr.bf16.mxu0 0
        %774 = vmatpush1.bf16.msra.mxu0 %v762
        %775 = vmatprep.subr.bf16.mxu0 0
        %776 = vmatpush1.bf16.msra.mxu0 %v763
        %777 = vmatprep.subr.bf16.mxu0 0
        %778 = vmatpush1.bf16.msra.mxu0 %v771
        %779 = vmatprep.subr.bf16.mxu0 0
        %780 = vmatpush1.bf16.msra.mxu0 0
        %781 = vmatprep.subr.bf16.mxu0 0
        %782 = vmatpush1.bf16.msra.mxu0 0
        %783 = vmatprep.subr.bf16.mxu0 0
        %784 = vmatpush1.bf16.msra.mxu0 0
        %785 = vmatprep.subr.bf16.mxu0 0
        %786 = vmatpush1.bf16.msra.mxu0 0
        %787 = vmatprep.subr.bf16.mxu0 0
        %788 = vmatpush1.bf16.msra.mxu0 0
        %789 = vmatprep.subr.bf16.mxu0 0
        %790 = vmatpush1.bf16.msra.mxu0 0
        %791 = vmatprep.subr.bf16.mxu0 0
        %792 = vmatpush1.bf16.msra.mxu0 0
        %793 = vmatprep.subr.bf16.mxu0 0
        %794 = vmatpush1.bf16.msra.mxu0 0
        %795 = vmatprep.subr.bf16.mxu0 0
        %796 = vmatpush1.bf16.msra.mxu0 0
        %797 = vmatprep.subr.bf16.mxu0 0
        %798 = vmatpush1.bf16.msra.mxu0 0
        %799 = vmatprep.subr.bf16.mxu0 0
        %800 = vmatpush1.bf16.msra.mxu0 0
        %801 = vmatprep.subr.bf16.mxu0 0
        %802 = vmatpush1.bf16.msra.mxu0 0
        %803 = vmatprep.subr.bf16.mxu0 0
        %804 = vmatpush1.bf16.msra.mxu0 0
        %805 = vmatprep.mubr.bf16.mxu0 0
        %806 = vmatmul.mubr.bf16.gmra.mrb[0].mxu0 %v768
        %v807 = vpop.f32.mrb[0].mxu0
        %v808 = vadd.f32 0.0, %v807
        %v809 = vpop.f32.mrb[0].mxu0
        %v810 = vpop.f32.mrb[0].mxu0
        %v811 = vpop.f32.mrb[0].mxu0
        %812 = vdwg.mxu0
        %v813 = vadd.f32 %v731, %v808
        %v814 = vld [vmem:[%s210 + $0x4] sm:$0xe]
        %s815 = scalar_lea.vmem [#allocation2], 160
        %v816 = vld [vmem:[%s815] sm:$0xf]
        %v817 = vld [vmem:[%s815 + $0x4] sm:$0xf]
        %v818 = vld [vmem:[%s815 + $0x8] sm:$0xf]
        %v819 = vld [vmem:[%s815 + $0xc] sm:$0xf]
        %v820 = vld [vmem:[%s815 + $0x10] sm:$0xf]
        %v822 = vunpack.c.l.b16 %v814
        %v823 = vpack.c.b16 %v743, %v822
        %v824 = vrot.slane %v823, 1
        %v830 = vunpack.c.l.b16 %v816
        %v831 = vunpack.c.l.b16 %v817
        %v832 = vunpack.c.l.b16 %v818
        %v833 = vunpack.c.l.b16 %v819
        %v834 = vunpack.c.l.b16 %v820
        %v835 = vpack.c.b16 %v831, %v830
        %v836 = vpack.c.b16 %v833, %v832
        %v837 = vpack.c.b16 %v834, %v834
        %v841 = vsel %vm252, %v824, 0
        %v844 = vsel %vm256, %v837, 0
        %846 = vmatprep.subr.bf16.mxu0 0
        %847 = vmatpush1.bf16.msra.mxu0 %v835
        %848 = vmatprep.subr.bf16.mxu0 0
        %849 = vmatpush1.bf16.msra.mxu0 %v836
        %850 = vmatprep.subr.bf16.mxu0 0
        %851 = vmatpush1.bf16.msra.mxu0 %v844
        %852 = vmatprep.subr.bf16.mxu0 0
        %853 = vmatpush1.bf16.msra.mxu0 0
        %854 = vmatprep.subr.bf16.mxu0 0
        %855 = vmatpush1.bf16.msra.mxu0 0
        %856 = vmatprep.subr.bf16.mxu0 0
        %857 = vmatpush1.bf16.msra.mxu0 0
        %858 = vmatprep.subr.bf16.mxu0 0
        %859 = vmatpush1.bf16.msra.mxu0 0
        %860 = vmatprep.subr.bf16.mxu0 0
        %861 = vmatpush1.bf16.msra.mxu0 0
        %862 = vmatprep.subr.bf16.mxu0 0
        %863 = vmatpush1.bf16.msra.mxu0 0
        %864 = vmatprep.subr.bf16.mxu0 0
        %865 = vmatpush1.bf16.msra.mxu0 0
        %866 = vmatprep.subr.bf16.mxu0 0
        %867 = vmatpush1.bf16.msra.mxu0 0
        %868 = vmatprep.subr.bf16.mxu0 0
        %869 = vmatpush1.bf16.msra.mxu0 0
        %870 = vmatprep.subr.bf16.mxu0 0
        %871 = vmatpush1.bf16.msra.mxu0 0
        %872 = vmatprep.subr.bf16.mxu0 0
        %873 = vmatpush1.bf16.msra.mxu0 0
        %874 = vmatprep.subr.bf16.mxu0 0
        %875 = vmatpush1.bf16.msra.mxu0 0
        %876 = vmatprep.subr.bf16.mxu0 0
        %877 = vmatpush1.bf16.msra.mxu0 0
        %878 = vmatprep.mubr.bf16.mxu0 0
        %879 = vmatmul.mubr.bf16.gmra.mrb[0].mxu0 %v841
        %v880 = vpop.f32.mrb[0].mxu0
        %v881 = vadd.f32 0.0, %v880
        %v882 = vpop.f32.mrb[0].mxu0
        %v883 = vpop.f32.mrb[0].mxu0
        %v884 = vpop.f32.mrb[0].mxu0
        %885 = vdwg.mxu0
        %v886 = vadd.f32 %v813, %v881
        %v887 = vld [vmem:[%s2] sm:$0x1]
        %v889 = vlaneseq
        %v890 = vshrl.u32 %v889, 7
        %v891 = vsub.s32 0, %v890
        %v892 = vrot.slane %v887, %v891
        %v894 = vmul.f32 %v886, %v892
        %v895 = vld [vmem:[%s3] sm:$0x1]
        %v897 = vlaneseq
        %v898 = vshrl.u32 %v897, 7
        %v899 = vsub.s32 0, %v898
        %v900 = vrot.slane %v895, %v899
        %v902 = vadd.f32 %v894, %v900
        %v903 = vmax.f32 %v902, 0.0
        %v904 = vpack.c.bf16 %v903, %v903
        %905 = vst [vmem:[%s205] sm:$0xf] %v904
        %s906 = sand.u32 %s116, 1
        %s907 = scalar_lea.sflag [#allocation4], %s906
        %s908 = sand.u32 %s116, 1
        %s909 = smul.addr %s908, 4
        %s910 = scalar_lea.vmem [#allocation5], %s909
        // Predicated region
        $region41: #{tpu_custom_call.1} parent=35 // pred_check
          %p911 = pneg %p126
        $region42: #{tpu_custom_call.1} parent=35 // pred_check_branch
          %913 = sbr.rel (%p911) target = $region44
        $region43: #{tpu_custom_call.1} parent=35 // pred_region
          %s915 = ssub.s32 64, 64
          %916 = vsyncadd %s907, %s915
          %s917 = smul.addr %s19, 64
          %s918 = scalar_lea.hbm %s4, %s917
          %s920 = sshll.u32 %s910, 4
          %s921 = int_to_ptr.vmem [resolvable:$true] %s920
          %923 = dma.vmem_to_hbm [thread:$0]  %s921, 64, %s918, %s907
        $region44: #{tpu_custom_call.1} parent=35 // pred_fallthru
          _
      $region36: #{tpu_custom_call.1} parent=5 // pred_fallthru
        _
      %p924 = scmp.le.s32.totalorder 2, %s14
      // Predicated region
      $region45: #{tpu_custom_call.1} parent=5 // pred_check
        %p925 = pneg %p924
      $region46: #{tpu_custom_call.1} parent=5 // pred_check_branch
        %927 = sbr.rel (%p925) target = $region48
      $region47: #{tpu_custom_call.1} parent=5 // pred_region
        %s928 = ssub.s32 %s14, 2
        // Predicated region
        $region49: #{tpu_custom_call.1} parent=47 // pred_check
          %p929 = pneg %p132
        $region50: #{tpu_custom_call.1} parent=47 // pred_check_branch
          %931 = sbr.rel (%p929) target = $region52
        $region51: #{tpu_custom_call.1} parent=47 // pred_region
          %s932 = sand.u32 %s117, 1
          %s933 = scalar_lea.sflag [#allocation4], %s932
          %s934 = sand.u32 %s117, 1
          %s935 = smul.addr %s934, 4
          %s936 = scalar_lea.vmem [#allocation5], %s935
          %937 = dma.done %s933, 64
        $region52: #{tpu_custom_call.1} parent=47 // pred_fallthru
          _
      $region48: #{tpu_custom_call.1} parent=5 // pred_fallthru
        _
    $region6: #{tpu_custom_call.1} parent=1 // loop_footer
      %s18 = sadd.s32 1, %s14
    $region7: #{tpu_custom_call.1} parent=1 // loop_footer_branch
      %13 = sbr.rel target = $region3
    $region8: #{tpu_custom_call.1} parent=1 // loop_exit
      _
    %938 = vsyncpa [#allocation3], 1
    %s939 = scalar_lea.sflag [#allocation3], 1
    %940 = vsyncpa %s939, 1
    %941 = vsyncpa [#allocation4], 1
    %s942 = scalar_lea.sflag [#allocation4], 1
    %943 = vsyncpa %s942, 1

</llo_original>
